<compile_context>
chip_gen: v5e
topology: v5e:2x2
jax: 0.10.0
libtpu: 0.0.40
codegen_flags: <defaults>
</compile_context>

<pallas_src>
import functools

import jax
import jax.numpy as jnp
from jax.experimental import pallas as pl
from jax.experimental.pallas import tpu as pltpu

LANE = 128
# A_hat bf16 (8 MiB at 2048^2) + activations stay comfortably under v7x's
# scoped VMEM; above this we stream A_hat tiles from HBM.
FUSED_MAX_NODES = 2048
STREAM_TILE = 512


# ----------------------------------------------------------------------------
# Fused path: both GCNConv layers in one kernel, A_hat resident in VMEM.
#   A_hat is read from HBM exactly once and h never round-trips through HBM.
# ----------------------------------------------------------------------------
def gcn_fused_kernel(a_ref, x_ref, w1_ref, b1_ref, w2_ref, b2_ref, o_ref):
    a = a_ref[...]                                                   # bf16
    z1 = jnp.dot(x_ref[...], w1_ref[...], preferred_element_type=jnp.float32)
    h = jnp.dot(a, z1.astype(a.dtype), preferred_element_type=jnp.float32)
    h = jnp.maximum(h + b1_ref[...], 0.0)                            # bias + relu, f32
    z2 = jnp.dot(h.astype(w2_ref.dtype), w2_ref[...],
                 preferred_element_type=jnp.float32)
    out = jnp.dot(a, z2.astype(a.dtype), preferred_element_type=jnp.float32)
    o_ref[...] = (out + b2_ref[...]).astype(o_ref.dtype)


def _gcn_fused(a_p, x_p, w1_p, b1_p, w2_p, b2_p):
    n_pad = a_p.shape[0]
    f_in, f_hid = w1_p.shape
    f_out = w2_p.shape[1]
    flops = int(2 * n_pad * (f_in * f_hid + n_pad * f_hid
                             + f_hid * f_out + n_pad * f_out))
    bytes_accessed = int(sum(t.size * t.dtype.itemsize
                             for t in (a_p, x_p, w1_p, b1_p, w2_p, b2_p))
                         + n_pad * f_out * 4)
    return pl.pallas_call(
        gcn_fused_kernel,
        out_shape=jax.ShapeDtypeStruct((n_pad, f_out), jnp.float32),
        compiler_params=pltpu.CompilerParams(
            vmem_limit_bytes=48 * 1024 * 1024),
        cost_estimate=pl.CostEstimate(
            flops=flops, transcendentals=0, bytes_accessed=bytes_accessed),
    )(a_p, x_p, w1_p, b1_p, w2_p, b2_p)


# ----------------------------------------------------------------------------
# Streaming path, kernel 1: Z = X @ W, tiled over row blocks (hoisted out of
# the aggregation reduction loop; computed exactly once).
# ----------------------------------------------------------------------------
def feature_transform_kernel(x_ref, w_ref, o_ref):
    o_ref[...] = jnp.dot(
        x_ref[...], w_ref[...], preferred_element_type=jnp.float32
    ).astype(o_ref.dtype)


def _feature_transform(x, w, *, tm):
    n_pad, f_in = x.shape
    f_out = w.shape[1]
    grid = (n_pad // tm,)
    flops = int(2 * n_pad * f_in * f_out)
    bytes_accessed = int(x.size * x.dtype.itemsize + w.size * w.dtype.itemsize
                         + n_pad * f_out * 2)
    return pl.pallas_call(
        feature_transform_kernel,
        out_shape=jax.ShapeDtypeStruct((n_pad, f_out), jnp.bfloat16),
        grid_spec=pltpu.PrefetchScalarGridSpec(
            num_scalar_prefetch=0,
            grid=grid,
            in_specs=[
                pl.BlockSpec((tm, f_in), lambda i: (i, 0)),       # X row block
                pl.BlockSpec((f_in, f_out), lambda i: (0, 0)),    # W (resident)
            ],
            out_specs=pl.BlockSpec((tm, f_out), lambda i: (i, 0)),
        ),
        compiler_params=pltpu.CompilerParams(
            dimension_semantics=("parallel",),
            vmem_limit_bytes=32 * 1024 * 1024),
        cost_estimate=pl.CostEstimate(
            flops=flops, transcendentals=0, bytes_accessed=bytes_accessed),
    )(x, w)


# ----------------------------------------------------------------------------
# Streaming path, kernel 2: o = [relu](A_hat @ Z + b)
# grid = (A_hat row blocks, neighbor/column blocks)   (parallel, arbitrary)
# ----------------------------------------------------------------------------
def aggregate_kernel(a_ref, z_ref, b_ref, o_ref, acc_ref, *, relu):
    k = pl.program_id(1)

    @pl.when(k == 0)
    def _init():
        acc_ref[...] = jnp.zeros_like(acc_ref)

    acc_ref[...] += jnp.dot(a_ref[...], z_ref[...],
                            preferred_element_type=jnp.float32)

    @pl.when(k == pl.num_programs(1) - 1)
    def _finalize():
        r = acc_ref[...] + b_ref[...]          # bias added once, in f32
        if relu:
            r = jnp.maximum(r, 0.0)
        o_ref[...] = r.astype(o_ref.dtype)     # lane-dense store


def _aggregate(a_hat, z, b, *, relu, out_dtype, tm, tk):
    n_pad = a_hat.shape[0]
    f_out = z.shape[1]
    grid = (n_pad // tm, n_pad // tk)
    flops = int(2 * n_pad * n_pad * f_out)
    bytes_accessed = int(
        a_hat.size * a_hat.dtype.itemsize
        + grid[0] * z.size * z.dtype.itemsize          # Z re-streamed per row block
        + b.size * b.dtype.itemsize
        + n_pad * f_out * jnp.dtype(out_dtype).itemsize)
    return pl.pallas_call(
        functools.partial(aggregate_kernel, relu=relu),
        out_shape=jax.ShapeDtypeStruct((n_pad, f_out), out_dtype),
        grid_spec=pltpu.PrefetchScalarGridSpec(
            num_scalar_prefetch=0,
            grid=grid,
            in_specs=[
                # TODO(synk): add pipeline_mode=pl.Buffered(3) on the A_hat
                # spec if its DMA is still exposed behind the short per-step
                # compute after the 512-wide tiles.
                pl.BlockSpec((tm, tk), lambda i, k: (i, k)),       # A_hat tile
                pl.BlockSpec((tk, f_out), lambda i, k: (k, 0)),    # Z neighbor rows
                pl.BlockSpec((1, f_out), lambda i, k: (0, 0)),     # bias (resident)
            ],
            out_specs=pl.BlockSpec((tm, f_out), lambda i, k: (i, 0)),
            scratch_shapes=[pltpu.VMEM((tm, f_out), jnp.float32)],  # accumulator
        ),
        compiler_params=pltpu.CompilerParams(
            dimension_semantics=("parallel", "arbitrary"),
            vmem_limit_bytes=32 * 1024 * 1024),
        cost_estimate=pl.CostEstimate(
            flops=flops, transcendentals=0, bytes_accessed=bytes_accessed),
    )(a_hat, z, b)


# ----------------------------------------------------------------------------
# Wrapper: padding / casting glue + path selection
# ----------------------------------------------------------------------------
def _round_up(a, b):
    return ((a + b - 1) // b) * b


def _pad2d(x, rows, cols):
    return jnp.pad(x, ((0, rows - x.shape[0]), (0, cols - x.shape[1])))


def gcn_forward(a_hat, x, w1, b1, w2, b2, *, fused_max_nodes=FUSED_MAX_NODES):
    """Two-layer GCN forward. Returns (N, embedding_dim) float32."""
    n = a_hat.shape[0]
    embed = w2.shape[1]

    f_in = _round_up(x.shape[1], LANE)
    f_hid = _round_up(w1.shape[1], LANE)
    f_out = _round_up(embed, LANE)

    n_pad = _round_up(n, LANE)
    fused = n_pad <= fused_max_nodes
    if not fused:
        # Streaming path: pad to the tile width so tm=tk=512 divides n_pad;
        # grid[0] >= 2 keeps both v7x TensorCores busy for any n_pad >= 1024.
        n_pad = _round_up(n, STREAM_TILE)

    # bf16 operands for the MXU (f32 accumulation in-kernel); biases stay f32.
    # Note: keeping A_hat bf16 trades ~0.4% relative error for half the HBM
    # traffic on the dominant operand; use f32 here if precision matters more.
    a_p = _pad2d(a_hat, n_pad, n_pad).astype(jnp.bfloat16)
    x_p = _pad2d(x, n_pad, f_in).astype(jnp.bfloat16)
    w1_p = _pad2d(w1, f_in, f_hid).astype(jnp.bfloat16)
    b1_p = _pad2d(b1, 1, f_hid).astype(jnp.float32)
    w2_p = _pad2d(w2, f_hid, f_out).astype(jnp.bfloat16)
    b2_p = _pad2d(b2, 1, f_out).astype(jnp.float32)

    if fused:
        out = _gcn_fused(a_p, x_p, w1_p, b1_p, w2_p, b2_p)
    else:
        tm = STREAM_TILE if n_pad >= 2 * STREAM_TILE else n_pad
        tk = STREAM_TILE
        # Padded rows of h become relu(b1) (nonzero in general); this is safe
        # because A_hat's padded columns are zero, so they never contribute.
        z1 = _feature_transform(x_p, w1_p, tm=tm)
        h = _aggregate(a_p, z1, b1_p, relu=True, out_dtype=jnp.bfloat16,
                       tm=tm, tk=tk)
        z2 = _feature_transform(h, w2_p, tm=tm)
        out = _aggregate(a_p, z2, b2_p, relu=False, out_dtype=jnp.float32,
                         tm=tm, tk=tk)

    # Slice the real nodes / real embedding columns off the lane-dense slab.
    return out[:n, :embed]


# ----------------------------------------------------------------------------
# Glue: dense normalized adjacency from edge_index (plain JAX).
# TODO(synk): for large sparse graphs, add a scalar-prefetch CSR block-gather
# path so empty A_hat tiles are never DMA'd or multiplied.
# ----------------------------------------------------------------------------
def build_normalized_adjacency(edge_index, num_nodes):
    """A_hat with exactly one self-loop per node (gcn_norm semantics)."""
    src = edge_index[0]
    dst = edge_index[1]
    adj = jnp.zeros((num_nodes, num_nodes), dtype=jnp.float32)
    adj = adj.at[dst, src].add(1.0)
    eye = jnp.eye(num_nodes, dtype=jnp.float32)
    adj = adj * (1.0 - eye) + eye  # add_remaining_self_loops: diag forced to 1
    deg = adj.sum(axis=1)
    dinv = jnp.where(deg > 0, jax.lax.rsqrt(deg), 0.0)
    return adj * dinv[:, None] * dinv[None, :]


# ----------------------------------------------------------------------------
# Pure-JAX f32 reference
# ----------------------------------------------------------------------------
def gcn_ref(a_hat, x, w1, b1, w2, b2):
    h = jnp.maximum(a_hat @ (x @ w1) + b1, 0.0)
    return a_hat @ (h @ w2) + b2


if __name__ == "__main__":
    key = jax.random.PRNGKey(0)

    # Module-consistent shapes: in_channels fixed at 16 by the module.
    in_channels = 16
    hidden_channels = 32
    embedding_dim = 8

    def make_case(case_key, num_nodes, num_edges):
        k_x, k_e1, k_e2, k_w1, k_w2 = jax.random.split(case_key, 5)
        x = jax.random.normal(k_x, (num_nodes, in_channels), dtype=jnp.float32)
        src = jax.random.randint(k_e1, (num_edges,), 0, num_nodes, jnp.int32)
        dst = jax.random.randint(k_e2, (num_edges,), 0, num_nodes, jnp.int32)
        edge_index = jnp.stack([src, dst], axis=0)
        # GCNConv weight is [in, out]; bias zero-initialized as in torch_geometric.
        w1 = jax.random.normal(k_w1, (in_channels, hidden_channels),
                               jnp.float32) * (1.0 / jnp.sqrt(in_channels))
        b1 = jnp.zeros((1, hidden_channels), jnp.float32)
        w2 = jax.random.normal(k_w2, (hidden_channels, embedding_dim),
                               jnp.float32) * (1.0 / jnp.sqrt(hidden_channels))
        b2 = jnp.zeros((1, embedding_dim), jnp.float32)
        a_hat = build_normalized_adjacency(edge_index, num_nodes)
        return a_hat, x, w1, b1, w2, b2

    k1, k2 = jax.random.split(key)

    # Case 1: small graph -> fully fused single-kernel path (A_hat VMEM-resident).
    a_hat, x, w1, b1, w2, b2 = make_case(k1, num_nodes=64, num_edges=128)
    out = jax.block_until_ready(gcn_forward(a_hat, x, w1, b1, w2, b2))
    ref = gcn_ref(a_hat, x, w1, b1, w2, b2)
    assert out.shape == (64, embedding_dim)
    assert jnp.allclose(out, ref, atol=5e-2, rtol=5e-2), (
        float(jnp.max(jnp.abs(out - ref)))
    )

    # Case 2: force the streaming path (hoisted X@W kernel + tiled A_hat@Z
    # accumulation) to exercise both kernels and the megacore row-block grid.
    a_hat, x, w1, b1, w2, b2 = make_case(k2, num_nodes=600, num_edges=2048)
    out = jax.block_until_ready(
        gcn_forward(a_hat, x, w1, b1, w2, b2, fused_max_nodes=0))
    ref = gcn_ref(a_hat, x, w1, b1, w2, b2)
    assert out.shape == (600, embedding_dim)
    assert jnp.allclose(out, ref, atol=5e-2, rtol=5e-2), (
        float(jnp.max(jnp.abs(out - ref)))
    )

    print("KERNEL_OK")
</pallas_src>

<mosaic_0001>
module attributes {stable_mosaic.version = 11 : i64} {
  func.func @gcn_fused_kernel(%arg0: memref<128x128xbf16, #tpu.memory_space<vmem>>, %arg1: memref<128x128xbf16, #tpu.memory_space<vmem>>, %arg2: memref<128x128xbf16, #tpu.memory_space<vmem>>, %arg3: memref<1x128xf32, #tpu.memory_space<vmem>>, %arg4: memref<128x128xbf16, #tpu.memory_space<vmem>>, %arg5: memref<1x128xf32, #tpu.memory_space<vmem>>, %arg6: memref<128x128xf32, #tpu.memory_space<vmem>>) attributes {dimension_semantics = [], scalar_prefetch = 0 : i64, scratch_operands = 0 : i64, tpu.core_type = #tpu.core_type<tc>} {
    %c0 = arith.constant 0 : index
    %c0_0 = arith.constant 0 : index
    %0 = vector.load %arg0[%c0, %c0_0] : memref<128x128xbf16, #tpu.memory_space<vmem>>, vector<128x128xbf16>
    %c0_1 = arith.constant 0 : index
    %c0_2 = arith.constant 0 : index
    %1 = vector.load %arg1[%c0_1, %c0_2] : memref<128x128xbf16, #tpu.memory_space<vmem>>, vector<128x128xbf16>
    %c0_3 = arith.constant 0 : index
    %c0_4 = arith.constant 0 : index
    %2 = vector.load %arg2[%c0_3, %c0_4] : memref<128x128xbf16, #tpu.memory_space<vmem>>, vector<128x128xbf16>
    %cst = arith.constant dense<0.000000e+00> : vector<128x128xf32>
    %3 = tpu.matmul %1, %2, %cst {dimension_numbers = #tpu.dot_dimension_numbers<[1], [0], [0], [1], [0, 0, 1, 1], [], []>} : vector<128x128xbf16>, vector<128x128xbf16>, vector<128x128xf32> -> vector<128x128xf32>
    %4 = arith.truncf %3 : vector<128x128xf32> to vector<128x128xbf16>
    %cst_5 = arith.constant dense<0.000000e+00> : vector<128x128xf32>
    %5 = tpu.matmul %0, %4, %cst_5 {dimension_numbers = #tpu.dot_dimension_numbers<[1], [0], [0], [1], [0, 0, 1, 1], [], []>} : vector<128x128xbf16>, vector<128x128xbf16>, vector<128x128xf32> -> vector<128x128xf32>
    %c0_6 = arith.constant 0 : index
    %c0_7 = arith.constant 0 : index
    %6 = vector.load %arg3[%c0_6, %c0_7] : memref<1x128xf32, #tpu.memory_space<vmem>>, vector<1x128xf32>
    %7 = vector.broadcast %6 : vector<1x128xf32> to vector<128x128xf32>
    %8 = arith.addf %5, %7 : vector<128x128xf32>
    %cst_8 = arith.constant 0.000000e+00 : f32
    %9 = vector.broadcast %cst_8 : f32 to vector<128x128xf32>
    %10 = arith.maximumf %8, %9 : vector<128x128xf32>
    %11 = arith.truncf %10 : vector<128x128xf32> to vector<128x128xbf16>
    %c0_9 = arith.constant 0 : index
    %c0_10 = arith.constant 0 : index
    %12 = vector.load %arg4[%c0_9, %c0_10] : memref<128x128xbf16, #tpu.memory_space<vmem>>, vector<128x128xbf16>
    %cst_11 = arith.constant dense<0.000000e+00> : vector<128x128xf32>
    %13 = tpu.matmul %11, %12, %cst_11 {dimension_numbers = #tpu.dot_dimension_numbers<[1], [0], [0], [1], [0, 0, 1, 1], [], []>} : vector<128x128xbf16>, vector<128x128xbf16>, vector<128x128xf32> -> vector<128x128xf32>
    %14 = arith.truncf %13 : vector<128x128xf32> to vector<128x128xbf16>
    %cst_12 = arith.constant dense<0.000000e+00> : vector<128x128xf32>
    %15 = tpu.matmul %0, %14, %cst_12 {dimension_numbers = #tpu.dot_dimension_numbers<[1], [0], [0], [1], [0, 0, 1, 1], [], []>} : vector<128x128xbf16>, vector<128x128xbf16>, vector<128x128xf32> -> vector<128x128xf32>
    %c0_13 = arith.constant 0 : index
    %c0_14 = arith.constant 0 : index
    %16 = vector.load %arg5[%c0_13, %c0_14] : memref<1x128xf32, #tpu.memory_space<vmem>>, vector<1x128xf32>
    %17 = vector.broadcast %16 : vector<1x128xf32> to vector<128x128xf32>
    %18 = arith.addf %15, %17 : vector<128x128xf32>
    %c0_15 = arith.constant 0 : index
    %c0_16 = arith.constant 0 : index
    %19 = vector.load %arg6[%c0_15, %c0_16] : memref<128x128xf32, #tpu.memory_space<vmem>>, vector<128x128xf32>
    tpu.vector_store %arg6[%c0_15, %c0_16], %18 {strides = array<i32>} : memref<128x128xf32, #tpu.memory_space<vmem>>, vector<128x128xf32>,
    return
  }
}

</mosaic_0001>

<llo_original>
// kernel: tpu_custom_call.1
$region0: #{tpu_custom_call.1}
  #allocation0 [shape = 'u32[]', space=smem, size = 0x4, offset = 0x4, fixed_abs, tag = 'smem constant byte address 0x4 - core index']
  #allocation1 [shape = 'u32[72,128]{1,0:T(1,128)}', space=vmem, size = 0x9000, scoped, tag = 'internal scratch']
  %s0 = inlined_call_operand.hbm [shape: bf16[128,128], index: 0, kind: input, shape index: {}]
  %s1 = inlined_call_operand.hbm [shape: bf16[128,128], index: 1, kind: input, shape index: {}]
  %s2 = inlined_call_operand.hbm [shape: bf16[128,128], index: 2, kind: input, shape index: {}]
  %s3 = inlined_call_operand.vmem [shape: f32[1,128], index: 3, kind: input, shape index: {}]
  %s4 = inlined_call_operand.hbm [shape: bf16[128,128], index: 4, kind: input, shape index: {}]
  %s5 = inlined_call_operand.vmem [shape: f32[1,128], index: 5, kind: input, shape index: {}]
  %s6 = inlined_call_operand.hbm [shape: f32[128,128], index: 6, kind: output, shape index: {}]
  %s7 = sld [smem:[#allocation0]]
  $region50: #{tpu_custom_call.1} parent=0
    _
  %s9 = ssub.s32 1, %s7
  %s10 = scalar_select 0, %s9, %s7
  $region1: #{tpu_custom_call.1} parent=0
    #allocation2 [shape = 'u8[32768]{0}', space=vmem, size = 0x8000, scoped, tag = 'input window, operand 0, single buffered']
    #allocation3 [shape = 's32[1]{0}', space=sflag, size = 0x4, scoped, tag = 'scoped memory for tpu_custom_call.1']
    #allocation4 [shape = 's32[1]{0}', space=sflag, size = 0x4, scoped, tag = 'scoped memory for tpu_custom_call.1']
    #allocation5 [shape = 'u8[32768]{0}', space=vmem, size = 0x8000, scoped, tag = 'input window, operand 1, single buffered']
    #allocation6 [shape = 's32[1]{0}', space=sflag, size = 0x4, scoped, tag = 'scoped memory for tpu_custom_call.1']
    #allocation7 [shape = 'u8[32768]{0}', space=vmem, size = 0x8000, scoped, tag = 'input window, operand 2, single buffered']
    #allocation8 [shape = 'u8[32768]{0}', space=vmem, size = 0x8000, scoped, tag = 'input window, operand 4, single buffered']
    #allocation9 [shape = 's32[1]{0}', space=sflag, size = 0x4, scoped, tag = 'scoped memory for tpu_custom_call.1']
    #allocation10 [shape = 'u8[65536]{0}', space=vmem, size = 0x10000, scoped, tag = 'output window, operand 0, single buffered']
    %11 = vsyncpa [#allocation3], 0
    %12 = vsyncpa [#allocation6], 0
    %13 = vsyncpa [#allocation9], 0
    %14 = vsyncpa [#allocation4], 0
    // Predicated region
    $region2: #{tpu_custom_call.1} parent=1 // pred_check
      _
    $region3: #{tpu_custom_call.1} parent=1 // pred_check_branch
      %16 = sbr.rel (0) target = $region5
    $region4: #{tpu_custom_call.1} parent=1 // pred_region
      %18 = vsyncadd [#allocation3], 0
      %s19 = sshll.u32 %s0, 4
      %s20 = int_to_ptr.hbm [resolvable:$true] %s19
      %s21 = sshll.u32 [#allocation2], 4
      %s22 = int_to_ptr.vmem [resolvable:$true] %s21
      %27 = dma.hbm_to_vmem [thread:$0]  %s20, 1024, %s22, [#allocation3], 64, 64, 4
    $region5: #{tpu_custom_call.1} parent=1 // pred_fallthru
      _
    // Predicated region
    $region6: #{tpu_custom_call.1} parent=1 // pred_check
      _
    $region7: #{tpu_custom_call.1} parent=1 // pred_check_branch
      %29 = sbr.rel (0) target = $region9
    $region8: #{tpu_custom_call.1} parent=1 // pred_region
      %31 = vsyncadd [#allocation6], 0
      %s32 = sshll.u32 %s1, 4
      %s33 = int_to_ptr.hbm [resolvable:$true] %s32
      %s34 = sshll.u32 [#allocation5], 4
      %s35 = int_to_ptr.vmem [resolvable:$true] %s34
      %40 = dma.hbm_to_vmem [thread:$0]  %s33, 1024, %s35, [#allocation6], 64, 64, 4
    $region9: #{tpu_custom_call.1} parent=1 // pred_fallthru
      _
    // Predicated region
    $region10: #{tpu_custom_call.1} parent=1 // pred_check
      _
    $region11: #{tpu_custom_call.1} parent=1 // pred_check_branch
      %42 = sbr.rel (0) target = $region13
    $region12: #{tpu_custom_call.1} parent=1 // pred_region
      %44 = vsyncadd [#allocation6], 0
      %s45 = sshll.u32 %s2, 4
      %s46 = int_to_ptr.hbm [resolvable:$true] %s45
      %s47 = sshll.u32 [#allocation7], 4
      %s48 = int_to_ptr.vmem [resolvable:$true] %s47
      %53 = dma.hbm_to_vmem [thread:$0]  %s46, 1024, %s48, [#allocation6], 64, 64, 4
    $region13: #{tpu_custom_call.1} parent=1 // pred_fallthru
      _
    // Predicated region
    $region14: #{tpu_custom_call.1} parent=1 // pred_check
      _
    $region15: #{tpu_custom_call.1} parent=1 // pred_check_branch
      %55 = sbr.rel (0) target = $region17
    $region16: #{tpu_custom_call.1} parent=1 // pred_region
      _
    $region17: #{tpu_custom_call.1} parent=1 // pred_fallthru
      _
    // Predicated region
    $region18: #{tpu_custom_call.1} parent=1 // pred_check
      _
    $region19: #{tpu_custom_call.1} parent=1 // pred_check_branch
      %57 = sbr.rel (0) target = $region21
    $region20: #{tpu_custom_call.1} parent=1 // pred_region
      %59 = vsyncadd [#allocation9], 0
      %s60 = sshll.u32 %s4, 4
      %s61 = int_to_ptr.hbm [resolvable:$true] %s60
      %s62 = sshll.u32 [#allocation8], 4
      %s63 = int_to_ptr.vmem [resolvable:$true] %s62
      %68 = dma.hbm_to_vmem [thread:$0]  %s61, 1024, %s63, [#allocation9], 64, 64, 4
    $region21: #{tpu_custom_call.1} parent=1 // pred_fallthru
      _
    // Predicated region
    $region22: #{tpu_custom_call.1} parent=1 // pred_check
      _
    $region23: #{tpu_custom_call.1} parent=1 // pred_check_branch
      %70 = sbr.rel (0) target = $region25
    $region24: #{tpu_custom_call.1} parent=1 // pred_region
      _
    $region25: #{tpu_custom_call.1} parent=1 // pred_fallthru
      _
    // Predicated region
    $region26: #{tpu_custom_call.1} parent=1 // pred_check
      _
    $region27: #{tpu_custom_call.1} parent=1 // pred_check_branch
      %72 = sbr.rel (0) target = $region29
    $region28: #{tpu_custom_call.1} parent=1 // pred_region
      %74 = dma.done [#allocation3], 1024
    $region29: #{tpu_custom_call.1} parent=1 // pred_fallthru
      _
    // Predicated region
    $region30: #{tpu_custom_call.1} parent=1 // pred_check
      _
    $region31: #{tpu_custom_call.1} parent=1 // pred_check_branch
      %76 = sbr.rel (0) target = $region33
    $region32: #{tpu_custom_call.1} parent=1 // pred_region
      %78 = dma.done [#allocation6], 1024
    $region33: #{tpu_custom_call.1} parent=1 // pred_fallthru
      _
    // Predicated region
    $region34: #{tpu_custom_call.1} parent=1 // pred_check
      _
    $region35: #{tpu_custom_call.1} parent=1 // pred_check_branch
      %80 = sbr.rel (0) target = $region37
    $region36: #{tpu_custom_call.1} parent=1 // pred_region
      %82 = dma.done [#allocation6], 1024
    $region37: #{tpu_custom_call.1} parent=1 // pred_fallthru
      _
    // Predicated region
    $region38: #{tpu_custom_call.1} parent=1 // pred_check
      _
    $region39: #{tpu_custom_call.1} parent=1 // pred_check_branch
      %84 = sbr.rel (0) target = $region41
    $region40: #{tpu_custom_call.1} parent=1 // pred_region
      %86 = dma.done [#allocation9], 1024
    $region41: #{tpu_custom_call.1} parent=1 // pred_fallthru
      _
    %v87 = vld [vmem:[#allocation2] sm:$0xf]
    %v88 = vld [vmem:[#allocation2 + $0x4] sm:$0xf]
    %v89 = vld [vmem:[#allocation2 + $0x8] sm:$0xf]
    %v90 = vld [vmem:[#allocation2 + $0xc] sm:$0xf]
    %v91 = vld [vmem:[#allocation2 + $0x10] sm:$0xf]
    %v92 = vld [vmem:[#allocation2 + $0x14] sm:$0xf]
    %v93 = vld [vmem:[#allocation2 + $0x18] sm:$0xf]
    %v94 = vld [vmem:[#allocation2 + $0x1c] sm:$0xf]
    %v95 = vld [vmem:[#allocation2 + $0x20] sm:$0xf]
    %v96 = vld [vmem:[#allocation2 + $0x24] sm:$0xf]
    %v97 = vld [vmem:[#allocation2 + $0x28] sm:$0xf]
    %v98 = vld [vmem:[#allocation2 + $0x2c] sm:$0xf]
    %v99 = vld [vmem:[#allocation2 + $0x30] sm:$0xf]
    %v100 = vld [vmem:[#allocation2 + $0x34] sm:$0xf]
    %v101 = vld [vmem:[#allocation2 + $0x38] sm:$0xf]
    %v102 = vld [vmem:[#allocation2 + $0x3c] sm:$0xf]
    %v103 = vld [vmem:[#allocation5] sm:$0xf]
    %v104 = vld [vmem:[#allocation5 + $0x4] sm:$0xf]
    %v105 = vld [vmem:[#allocation5 + $0x8] sm:$0xf]
    %v106 = vld [vmem:[#allocation5 + $0xc] sm:$0xf]
    %v107 = vld [vmem:[#allocation5 + $0x10] sm:$0xf]
    %v108 = vld [vmem:[#allocation5 + $0x14] sm:$0xf]
    %v109 = vld [vmem:[#allocation5 + $0x18] sm:$0xf]
    %v110 = vld [vmem:[#allocation5 + $0x1c] sm:$0xf]
    %v111 = vld [vmem:[#allocation5 + $0x20] sm:$0xf]
    %v112 = vld [vmem:[#allocation5 + $0x24] sm:$0xf]
    %v113 = vld [vmem:[#allocation5 + $0x28] sm:$0xf]
    %v114 = vld [vmem:[#allocation5 + $0x2c] sm:$0xf]
    %v115 = vld [vmem:[#allocation5 + $0x30] sm:$0xf]
    %v116 = vld [vmem:[#allocation5 + $0x34] sm:$0xf]
    %v117 = vld [vmem:[#allocation5 + $0x38] sm:$0xf]
    %v118 = vld [vmem:[#allocation5 + $0x3c] sm:$0xf]
    %v119 = vld [vmem:[#allocation7] sm:$0xf]
    %v120 = vld [vmem:[#allocation7 + $0x4] sm:$0xf]
    %v121 = vld [vmem:[#allocation7 + $0x8] sm:$0xf]
    %v122 = vld [vmem:[#allocation7 + $0xc] sm:$0xf]
    %v123 = vld [vmem:[#allocation7 + $0x10] sm:$0xf]
    %v124 = vld [vmem:[#allocation7 + $0x14] sm:$0xf]
    %v125 = vld [vmem:[#allocation7 + $0x18] sm:$0xf]
    %v126 = vld [vmem:[#allocation7 + $0x1c] sm:$0xf]
    %v127 = vld [vmem:[#allocation7 + $0x20] sm:$0xf]
    %v128 = vld [vmem:[#allocation7 + $0x24] sm:$0xf]
    %v129 = vld [vmem:[#allocation7 + $0x28] sm:$0xf]
    %v130 = vld [vmem:[#allocation7 + $0x2c] sm:$0xf]
    %v131 = vld [vmem:[#allocation7 + $0x30] sm:$0xf]
    %v132 = vld [vmem:[#allocation7 + $0x34] sm:$0xf]
    %v133 = vld [vmem:[#allocation7 + $0x38] sm:$0xf]
    %v134 = vld [vmem:[#allocation7 + $0x3c] sm:$0xf]
    %v151 = vunpack.c.l.b16 %v103
    %v152 = vunpack.c.l.b16 %v104
    %v153 = vunpack.c.l.b16 %v105
    %v154 = vunpack.c.l.b16 %v106
    %v155 = vunpack.c.l.b16 %v107
    %v156 = vunpack.c.l.b16 %v108
    %v157 = vunpack.c.l.b16 %v109
    %v158 = vunpack.c.l.b16 %v110
    %v159 = vunpack.c.l.b16 %v111
    %v160 = vunpack.c.l.b16 %v112
    %v161 = vunpack.c.l.b16 %v113
    %v162 = vunpack.c.l.b16 %v114
    %v163 = vunpack.c.l.b16 %v115
    %v164 = vunpack.c.l.b16 %v116
    %v165 = vunpack.c.l.b16 %v117
    %v166 = vunpack.c.l.b16 %v118
    %v167 = vpack.c.b16 %v152, %v151
    %v168 = vpack.c.b16 %v154, %v153
    %v169 = vpack.c.b16 %v156, %v155
    %v170 = vpack.c.b16 %v158, %v157
    %v171 = vpack.c.b16 %v160, %v159
    %v172 = vpack.c.b16 %v162, %v161
    %v173 = vpack.c.b16 %v164, %v163
    %v174 = vpack.c.b16 %v166, %v165
    %v199 = vunpack.c.l.b16 %v119
    %v200 = vunpack.c.l.b16 %v120
    %v201 = vunpack.c.l.b16 %v121
    %v202 = vunpack.c.l.b16 %v122
    %v203 = vunpack.c.l.b16 %v123
    %v204 = vunpack.c.l.b16 %v124
    %v205 = vunpack.c.l.b16 %v125
    %v206 = vunpack.c.l.b16 %v126
    %v207 = vunpack.c.l.b16 %v127
    %v208 = vunpack.c.l.b16 %v128
    %v209 = vunpack.c.l.b16 %v129
    %v210 = vunpack.c.l.b16 %v130
    %v211 = vunpack.c.l.b16 %v131
    %v212 = vunpack.c.l.b16 %v132
    %v213 = vunpack.c.l.b16 %v133
    %v214 = vunpack.c.l.b16 %v134
    %v215 = vpack.c.b16 %v200, %v199
    %v216 = vpack.c.b16 %v202, %v201
    %v217 = vpack.c.b16 %v204, %v203
    %v218 = vpack.c.b16 %v206, %v205
    %v219 = vpack.c.b16 %v208, %v207
    %v220 = vpack.c.b16 %v210, %v209
    %v221 = vpack.c.b16 %v212, %v211
    %v222 = vpack.c.b16 %v214, %v213
    %231 = vmatpush.bf16.msra.mxu0 %v222
    %232 = vmatpush.bf16.msra.mxu0 %v221
    %233 = vmatpush.bf16.msra.mxu0 %v220
    %234 = vmatpush.bf16.msra.mxu0 %v219
    %235 = vmatpush.bf16.msra.mxu0 %v218
    %236 = vmatpush.bf16.msra.mxu0 %v217
    %237 = vmatpush.bf16.msra.mxu0 %v216
    %238 = vmatpush.bf16.msra.mxu0 %v215
    %239 = vmatmul.bf16.gmra.mxu0 %v167
    %v240 = vpop.f32.mrf.mxu0
    %v241 = vadd.f32 0.0, %v240
    %v242 = vpop.f32.mrf.mxu0
    %v243 = vadd.f32 0.0, %v242
    %244 = vmatmul.bf16.gmra.mxu0 %v168
    %v245 = vpop.f32.mrf.mxu0
    %v246 = vadd.f32 0.0, %v245
    %v247 = vpop.f32.mrf.mxu0
    %v248 = vadd.f32 0.0, %v247
    %249 = vmatmul.bf16.gmra.mxu0 %v169
    %v250 = vpop.f32.mrf.mxu0
    %v251 = vadd.f32 0.0, %v250
    %v252 = vpop.f32.mrf.mxu0
    %v253 = vadd.f32 0.0, %v252
    %254 = vmatmul.bf16.gmra.mxu0 %v170
    %v255 = vpop.f32.mrf.mxu0
    %v256 = vadd.f32 0.0, %v255
    %v257 = vpop.f32.mrf.mxu0
    %v258 = vadd.f32 0.0, %v257
    %259 = vmatmul.bf16.gmra.mxu0 %v171
    %v260 = vpop.f32.mrf.mxu0
    %v261 = vadd.f32 0.0, %v260
    %v262 = vpop.f32.mrf.mxu0
    %v263 = vadd.f32 0.0, %v262
    %264 = vmatmul.bf16.gmra.mxu0 %v172
    %v265 = vpop.f32.mrf.mxu0
    %v266 = vadd.f32 0.0, %v265
    %v267 = vpop.f32.mrf.mxu0
    %v268 = vadd.f32 0.0, %v267
    %269 = vmatmul.bf16.gmra.mxu0 %v173
    %v270 = vpop.f32.mrf.mxu0
    %v271 = vadd.f32 0.0, %v270
    %v272 = vpop.f32.mrf.mxu0
    %v273 = vadd.f32 0.0, %v272
    %274 = vmatmul.bf16.gmra.mxu0 %v174
    %v275 = vpop.f32.mrf.mxu0
    %v276 = vadd.f32 0.0, %v275
    %v277 = vpop.f32.mrf.mxu0
    %v278 = vadd.f32 0.0, %v277
    %279 = vdwg.mxu0
    %v280 = vpack.c.bf16 %v243, %v241
    %v281 = vpack.c.bf16 %v248, %v246
    %v282 = vpack.c.bf16 %v253, %v251
    %v283 = vpack.c.bf16 %v258, %v256
    %v284 = vpack.c.bf16 %v263, %v261
    %v285 = vpack.c.bf16 %v268, %v266
    %v286 = vpack.c.bf16 %v273, %v271
    %v287 = vpack.c.bf16 %v278, %v276
    %v288 = vld [vmem:[%s3] sm:$0x1]
    %v290 = vperm.slane %v288, 0
    %v308 = vunpack.c.l.b16 %v87
    %v309 = vunpack.c.l.b16 %v88
    %v310 = vunpack.c.l.b16 %v89
    %v311 = vunpack.c.l.b16 %v90
    %v312 = vunpack.c.l.b16 %v91
    %v313 = vunpack.c.l.b16 %v92
    %v314 = vunpack.c.l.b16 %v93
    %v315 = vunpack.c.l.b16 %v94
    %v316 = vunpack.c.l.b16 %v95
    %v317 = vunpack.c.l.b16 %v96
    %v318 = vunpack.c.l.b16 %v97
    %v319 = vunpack.c.l.b16 %v98
    %v320 = vunpack.c.l.b16 %v99
    %v321 = vunpack.c.l.b16 %v100
    %v322 = vunpack.c.l.b16 %v101
    %v323 = vunpack.c.l.b16 %v102
    %v324 = vpack.c.b16 %v309, %v308
    %v325 = vpack.c.b16 %v311, %v310
    %v326 = vpack.c.b16 %v313, %v312
    %v327 = vpack.c.b16 %v315, %v314
    %v328 = vpack.c.b16 %v317, %v316
    %v329 = vpack.c.b16 %v319, %v318
    %v330 = vpack.c.b16 %v321, %v320
    %v331 = vpack.c.b16 %v323, %v322
    %340 = vmatpush.bf16.msra.mxu0 %v287
    %341 = vmatpush.bf16.msra.mxu0 %v286
    %342 = vmatpush.bf16.msra.mxu0 %v285
    %343 = vmatpush.bf16.msra.mxu0 %v284
    %344 = vmatpush.bf16.msra.mxu0 %v283
    %345 = vmatpush.bf16.msra.mxu0 %v282
    %346 = vmatpush.bf16.msra.mxu0 %v281
    %347 = vmatpush.bf16.msra.mxu0 %v280
    %348 = vmatmul.bf16.gmra.mxu0 %v324
    %v349 = vpop.f32.mrf.mxu0
    %v350 = vadd.f32 %v290, %v349
    %v351 = vpop.f32.mrf.mxu0
    %v352 = vadd.f32 %v290, %v351
    %353 = vmatmul.bf16.gmra.mxu0 %v325
    %v354 = vpop.f32.mrf.mxu0
    %v355 = vadd.f32 %v290, %v354
    %v356 = vpop.f32.mrf.mxu0
    %v357 = vadd.f32 %v290, %v356
    %358 = vmatmul.bf16.gmra.mxu0 %v326
    %v359 = vpop.f32.mrf.mxu0
    %v360 = vadd.f32 %v290, %v359
    %v361 = vpop.f32.mrf.mxu0
    %v362 = vadd.f32 %v290, %v361
    %363 = vmatmul.bf16.gmra.mxu0 %v327
    %v364 = vpop.f32.mrf.mxu0
    %v365 = vadd.f32 %v290, %v364
    %v366 = vpop.f32.mrf.mxu0
    %v367 = vadd.f32 %v290, %v366
    %368 = vmatmul.bf16.gmra.mxu0 %v328
    %v369 = vpop.f32.mrf.mxu0
    %v370 = vadd.f32 %v290, %v369
    %v371 = vpop.f32.mrf.mxu0
    %v372 = vadd.f32 %v290, %v371
    %373 = vmatmul.bf16.gmra.mxu0 %v329
    %v374 = vpop.f32.mrf.mxu0
    %v375 = vadd.f32 %v290, %v374
    %v376 = vpop.f32.mrf.mxu0
    %v377 = vadd.f32 %v290, %v376
    %378 = vmatmul.bf16.gmra.mxu0 %v330
    %v379 = vpop.f32.mrf.mxu0
    %v380 = vadd.f32 %v290, %v379
    %v381 = vpop.f32.mrf.mxu0
    %v382 = vadd.f32 %v290, %v381
    %383 = vmatmul.bf16.gmra.mxu0 %v331
    %v384 = vpop.f32.mrf.mxu0
    %v385 = vadd.f32 %v290, %v384
    %v386 = vpop.f32.mrf.mxu0
    %v387 = vadd.f32 %v290, %v386
    %388 = vdwg.mxu0
    %v389 = vmax.f32 %v350, 0.0
    %v390 = vmax.f32 %v352, 0.0
    %v391 = vmax.f32 %v355, 0.0
    %v392 = vmax.f32 %v357, 0.0
    %v393 = vmax.f32 %v360, 0.0
    %v394 = vmax.f32 %v362, 0.0
    %v395 = vmax.f32 %v365, 0.0
    %v396 = vmax.f32 %v367, 0.0
    %v397 = vmax.f32 %v370, 0.0
    %v398 = vmax.f32 %v372, 0.0
    %v399 = vmax.f32 %v375, 0.0
    %v400 = vmax.f32 %v377, 0.0
    %v401 = vmax.f32 %v380, 0.0
    %v402 = vmax.f32 %v382, 0.0
    %v403 = vmax.f32 %v385, 0.0
    %v404 = vmax.f32 %v387, 0.0
    %v405 = vpack.c.bf16 %v390, %v389
    %v406 = vpack.c.bf16 %v392, %v391
    %v407 = vpack.c.bf16 %v394, %v393
    %v408 = vpack.c.bf16 %v396, %v395
    %v409 = vpack.c.bf16 %v398, %v397
    %v410 = vpack.c.bf16 %v400, %v399
    %v411 = vpack.c.bf16 %v402, %v401
    %v412 = vpack.c.bf16 %v404, %v403
    %v413 = vld [vmem:[#allocation8] sm:$0xf]
    %v414 = vld [vmem:[#allocation8 + $0x4] sm:$0xf]
    %v415 = vld [vmem:[#allocation8 + $0x8] sm:$0xf]
    %v416 = vld [vmem:[#allocation8 + $0xc] sm:$0xf]
    %v417 = vld [vmem:[#allocation8 + $0x10] sm:$0xf]
    %v418 = vld [vmem:[#allocation8 + $0x14] sm:$0xf]
    %v419 = vld [vmem:[#allocation8 + $0x18] sm:$0xf]
    %v420 = vld [vmem:[#allocation8 + $0x1c] sm:$0xf]
    %v421 = vld [vmem:[#allocation8 + $0x20] sm:$0xf]
    %v422 = vld [vmem:[#allocation8 + $0x24] sm:$0xf]
    %v423 = vld [vmem:[#allocation8 + $0x28] sm:$0xf]
    %v424 = vld [vmem:[#allocation8 + $0x2c] sm:$0xf]
    %v425 = vld [vmem:[#allocation8 + $0x30] sm:$0xf]
    %v426 = vld [vmem:[#allocation8 + $0x34] sm:$0xf]
    %v427 = vld [vmem:[#allocation8 + $0x38] sm:$0xf]
    %v428 = vld [vmem:[#allocation8 + $0x3c] sm:$0xf]
    %v445 = vunpack.c.l.b16 %v413
    %v446 = vunpack.c.l.b16 %v414
    %v447 = vunpack.c.l.b16 %v415
    %v448 = vunpack.c.l.b16 %v416
    %v449 = vunpack.c.l.b16 %v417
    %v450 = vunpack.c.l.b16 %v418
    %v451 = vunpack.c.l.b16 %v419
    %v452 = vunpack.c.l.b16 %v420
    %v453 = vunpack.c.l.b16 %v421
    %v454 = vunpack.c.l.b16 %v422
    %v455 = vunpack.c.l.b16 %v423
    %v456 = vunpack.c.l.b16 %v424
    %v457 = vunpack.c.l.b16 %v425
    %v458 = vunpack.c.l.b16 %v426
    %v459 = vunpack.c.l.b16 %v427
    %v460 = vunpack.c.l.b16 %v428
    %v461 = vpack.c.b16 %v446, %v445
    %v462 = vpack.c.b16 %v448, %v447
    %v463 = vpack.c.b16 %v450, %v449
    %v464 = vpack.c.b16 %v452, %v451
    %v465 = vpack.c.b16 %v454, %v453
    %v466 = vpack.c.b16 %v456, %v455
    %v467 = vpack.c.b16 %v458, %v457
    %v468 = vpack.c.b16 %v460, %v459
    %477 = vmatpush.bf16.msra.mxu0 %v468
    %478 = vmatpush.bf16.msra.mxu0 %v467
    %479 = vmatpush.bf16.msra.mxu0 %v466
    %480 = vmatpush.bf16.msra.mxu0 %v465
    %481 = vmatpush.bf16.msra.mxu0 %v464
    %482 = vmatpush.bf16.msra.mxu0 %v463
    %483 = vmatpush.bf16.msra.mxu0 %v462
    %484 = vmatpush.bf16.msra.mxu0 %v461
    %485 = vmatmul.bf16.gmra.mxu0 %v405
    %v486 = vpop.f32.mrf.mxu0
    %v487 = vadd.f32 0.0, %v486
    %v488 = vpop.f32.mrf.mxu0
    %v489 = vadd.f32 0.0, %v488
    %490 = vmatmul.bf16.gmra.mxu0 %v406
    %v491 = vpop.f32.mrf.mxu0
    %v492 = vadd.f32 0.0, %v491
    %v493 = vpop.f32.mrf.mxu0
    %v494 = vadd.f32 0.0, %v493
    %495 = vmatmul.bf16.gmra.mxu0 %v407
    %v496 = vpop.f32.mrf.mxu0
    %v497 = vadd.f32 0.0, %v496
    %v498 = vpop.f32.mrf.mxu0
    %v499 = vadd.f32 0.0, %v498
    %500 = vmatmul.bf16.gmra.mxu0 %v408
    %v501 = vpop.f32.mrf.mxu0
    %v502 = vadd.f32 0.0, %v501
    %v503 = vpop.f32.mrf.mxu0
    %v504 = vadd.f32 0.0, %v503
    %505 = vmatmul.bf16.gmra.mxu0 %v409
    %v506 = vpop.f32.mrf.mxu0
    %v507 = vadd.f32 0.0, %v506
    %v508 = vpop.f32.mrf.mxu0
    %v509 = vadd.f32 0.0, %v508
    %510 = vmatmul.bf16.gmra.mxu0 %v410
    %v511 = vpop.f32.mrf.mxu0
    %v512 = vadd.f32 0.0, %v511
    %v513 = vpop.f32.mrf.mxu0
    %v514 = vadd.f32 0.0, %v513
    %515 = vmatmul.bf16.gmra.mxu0 %v411
    %v516 = vpop.f32.mrf.mxu0
    %v517 = vadd.f32 0.0, %v516
    %v518 = vpop.f32.mrf.mxu0
    %v519 = vadd.f32 0.0, %v518
    %520 = vmatmul.bf16.gmra.mxu0 %v412
    %v521 = vpop.f32.mrf.mxu0
    %v522 = vadd.f32 0.0, %v521
    %v523 = vpop.f32.mrf.mxu0
    %v524 = vadd.f32 0.0, %v523
    %525 = vdwg.mxu0
    %v526 = vpack.c.bf16 %v489, %v487
    %v527 = vpack.c.bf16 %v494, %v492
    %v528 = vpack.c.bf16 %v499, %v497
    %v529 = vpack.c.bf16 %v504, %v502
    %v530 = vpack.c.bf16 %v509, %v507
    %v531 = vpack.c.bf16 %v514, %v512
    %v532 = vpack.c.bf16 %v519, %v517
    %v533 = vpack.c.bf16 %v524, %v522
    %v534 = vld [vmem:[%s5] sm:$0x1]
    %v536 = vperm.slane %v534, 0
    %538 = vmatpush.bf16.msra.mxu0 %v533
    %539 = vmatpush.bf16.msra.mxu0 %v532
    %540 = vmatpush.bf16.msra.mxu0 %v531
    %541 = vmatpush.bf16.msra.mxu0 %v530
    %542 = vmatpush.bf16.msra.mxu0 %v529
    %543 = vmatpush.bf16.msra.mxu0 %v528
    %544 = vmatpush.bf16.msra.mxu0 %v527
    %545 = vmatpush.bf16.msra.mxu0 %v526
    %546 = vmatmul.bf16.gmra.mxu0 %v324
    %v547 = vpop.f32.mrf.mxu0
    %v548 = vadd.f32 %v536, %v547
    %v549 = vpop.f32.mrf.mxu0
    %v550 = vadd.f32 %v536, %v549
    %551 = vmatmul.bf16.gmra.mxu0 %v325
    %v552 = vpop.f32.mrf.mxu0
    %v553 = vadd.f32 %v536, %v552
    %v554 = vpop.f32.mrf.mxu0
    %v555 = vadd.f32 %v536, %v554
    %556 = vmatmul.bf16.gmra.mxu0 %v326
    %v557 = vpop.f32.mrf.mxu0
    %v558 = vadd.f32 %v536, %v557
    %v559 = vpop.f32.mrf.mxu0
    %v560 = vadd.f32 %v536, %v559
    %561 = vmatmul.bf16.gmra.mxu0 %v327
    %v562 = vpop.f32.mrf.mxu0
    %v563 = vadd.f32 %v536, %v562
    %v564 = vpop.f32.mrf.mxu0
    %v565 = vadd.f32 %v536, %v564
    %566 = vmatmul.bf16.gmra.mxu0 %v328
    %v567 = vpop.f32.mrf.mxu0
    %v568 = vadd.f32 %v536, %v567
    %v569 = vpop.f32.mrf.mxu0
    %v570 = vadd.f32 %v536, %v569
    %571 = vmatmul.bf16.gmra.mxu0 %v329
    %v572 = vpop.f32.mrf.mxu0
    %v573 = vadd.f32 %v536, %v572
    %v574 = vpop.f32.mrf.mxu0
    %v575 = vadd.f32 %v536, %v574
    %576 = vmatmul.bf16.gmra.mxu0 %v330
    %v577 = vpop.f32.mrf.mxu0
    %v578 = vadd.f32 %v536, %v577
    %v579 = vpop.f32.mrf.mxu0
    %v580 = vadd.f32 %v536, %v579
    %581 = vmatmul.bf16.gmra.mxu0 %v331
    %v582 = vpop.f32.mrf.mxu0
    %v583 = vadd.f32 %v536, %v582
    %v584 = vpop.f32.mrf.mxu0
    %v585 = vadd.f32 %v536, %v584
    %586 = vdwg.mxu0
    %587 = vst [vmem:[#allocation10] sm:$0xff] %v548
    %588 = vst [vmem:[#allocation10 + $0x8] sm:$0xff] %v550
    %589 = vst [vmem:[#allocation10 + $0x10] sm:$0xff] %v553
    %590 = vst [vmem:[#allocation10 + $0x18] sm:$0xff] %v555
    %591 = vst [vmem:[#allocation10 + $0x20] sm:$0xff] %v558
    %592 = vst [vmem:[#allocation10 + $0x28] sm:$0xff] %v560
    %593 = vst [vmem:[#allocation10 + $0x30] sm:$0xff] %v563
    %594 = vst [vmem:[#allocation10 + $0x38] sm:$0xff] %v565
    %595 = vst [vmem:[#allocation10 + $0x40] sm:$0xff] %v568
    %596 = vst [vmem:[#allocation10 + $0x48] sm:$0xff] %v570
    %597 = vst [vmem:[#allocation10 + $0x50] sm:$0xff] %v573
    %598 = vst [vmem:[#allocation10 + $0x58] sm:$0xff] %v575
    %599 = vst [vmem:[#allocation10 + $0x60] sm:$0xff] %v578
    %600 = vst [vmem:[#allocation10 + $0x68] sm:$0xff] %v580
    %601 = vst [vmem:[#allocation10 + $0x70] sm:$0xff] %v583
    %602 = vst [vmem:[#allocation10 + $0x78] sm:$0xff] %v585
    // Predicated region
    $region42: #{tpu_custom_call.1} parent=1 // pred_check
      _
    $region43: #{tpu_custom_call.1} parent=1 // pred_check_branch
      %604 = sbr.rel (0) target = $region45
    $region44: #{tpu_custom_call.1} parent=1 // pred_region
      %606 = vsyncadd [#allocation4], 0
      %s607 = sshll.u32 [#allocation10], 4
      %s608 = int_to_ptr.vmem [resolvable:$true] %s607
      %s609 = sshll.u32 %s6, 4
      %s610 = int_to_ptr.hbm [resolvable:$true] %s609
      %615 = dma.vmem_to_hbm [thread:$0]  %s608, 2048, %s610, [#allocation4], 128, 128, 8
    $region45: #{tpu_custom_call.1} parent=1 // pred_fallthru
      _
    // Predicated region
    $region46: #{tpu_custom_call.1} parent=1 // pred_check
      _
    $region47: #{tpu_custom_call.1} parent=1 // pred_check_branch
      %617 = sbr.rel (0) target = $region49
    $region48: #{tpu_custom_call.1} parent=1 // pred_region
      %619 = dma.done [#allocation4], 2048
    $region49: #{tpu_custom_call.1} parent=1 // pred_fallthru
      _
    %620 = vsyncpa [#allocation3], 1
    %621 = vsyncpa [#allocation6], 1
    %622 = vsyncpa [#allocation9], 1
    %623 = vsyncpa [#allocation4], 1

</llo_original>
